<compile_context>
chip_gen: v5e
topology: v5e:2x2
jax: 0.10.0
libtpu: 0.0.40
codegen_flags: <defaults>
</compile_context>

<pallas_src>
import functools

import numpy as np
import jax
import jax.numpy as jnp
from jax.experimental import pallas as pl
from jax.experimental.pallas import tpu as pltpu


def ldam_kernel(s_ref, tgt_ref, x_ref, m_ref, out_ref, *, n_total, inv_n):
    # s_ref:   (1,)          f32 SMEM  -- scale factor s (whole-array resident)
    # tgt_ref: (TILE_N, 1)   i32 VMEM  -- target class indices for this tile
    # x_ref:   (TILE_N, C)   any VMEM  -- logits tile (native dtype)
    # m_ref:   (1, C)        f32 VMEM  -- per-class margins (resident across grid)
    # out_ref: (1, 1, 128)   f32 VMEM  -- lane-padded per-tile partial sum
    i = pl.program_id(0)

    x = x_ref[...].astype(jnp.float32)          # (TILE_N, C)
    m = m_ref[...].astype(jnp.float32)          # (1, C)
    tgt = tgt_ref[...]                          # (TILE_N, 1) int32
    s = s_ref[0]

    tn, c = x.shape
    col = jax.lax.broadcasted_iota(jnp.int32, (tn, c), 1)
    hit = col == tgt                            # bool one-hot (scatter_(1, target, 1))

    # batch_m = m_list[target] per row; subtract margin only on the target column.
    batch_m = jnp.sum(jnp.where(hit, m, 0.0), axis=1, keepdims=True)   # (TILE_N, 1)
    z = s * jnp.where(hit, x - batch_m, x)                              # (TILE_N, C)

    # cross_entropy(z, target) = logsumexp(z) - z[target]
    zmax = jnp.max(z, axis=1, keepdims=True)
    lse = jnp.log(jnp.sum(jnp.exp(z - zmax), axis=1, keepdims=True)) + zmax
    z_t = jnp.sum(jnp.where(hit, z, 0.0), axis=1, keepdims=True)
    per_sample = lse - z_t                                              # (TILE_N, 1)

    # Mask rows of the ragged last tile (garbage beyond n_total).
    row = i * tn + jax.lax.broadcasted_iota(jnp.int32, (tn, 1), 0)
    per_sample = jnp.where(row < n_total, per_sample, 0.0)

    # Partial contribution to the mean (multiply by 1/N, no divide).
    tile_sum = jnp.sum(per_sample) * inv_n

    lane = jax.lax.broadcasted_iota(jnp.int32, (1, 1, 128), 2)
    out_ref[...] = jnp.where(lane == 0, tile_sum, jnp.float32(0.0))


def _pick_tile_n(n, c, itemsize):
    # ~8 MiB per x tile => ~16 MiB double-buffered, safely under 32 MiB scoped
    # VMEM (and v7x's 64 MiB physical VMEM). Cap at 1024 rows; round to 8.
    budget_per_tile = 8 * 1024 * 1024
    tile = budget_per_tile // max(1, c * itemsize)
    tile = max(8, min(1024, tile))
    n_pad = ((n + 7) // 8) * 8
    tile = min(tile, n_pad)
    return max(8, (tile // 8) * 8)


def ldam_loss_pallas(x, target, m_list, s, tile_n=None):
    n, c = x.shape
    if tile_n is None:
        tile_n = _pick_tile_n(n, c, jnp.dtype(x.dtype).itemsize)
    tile_n = max(8, (int(tile_n) // 8) * 8)
    num_tiles = pl.cdiv(n, tile_n)

    s_arr = jnp.asarray([s], dtype=jnp.float32)
    tgt = target.astype(jnp.int32).reshape(n, 1)
    m = m_list.astype(jnp.float32).reshape(1, c)

    kernel = functools.partial(ldam_kernel, n_total=n, inv_n=1.0 / float(n))

    partials = pl.pallas_call(
        kernel,
        out_shape=jax.ShapeDtypeStruct((num_tiles, 1, 128), jnp.float32),
        grid=(num_tiles,),
        in_specs=[
            pl.BlockSpec(memory_space=pltpu.MemorySpace.SMEM),   # s (whole, SMEM)
            pl.BlockSpec((tile_n, 1), lambda i: (i, 0)),         # target tile
            pl.BlockSpec((tile_n, c), lambda i: (i, 0)),         # logits tile
            pl.BlockSpec((1, c), lambda i: (0, 0)),              # m_list (resident)
        ],
        out_specs=pl.BlockSpec((1, 1, 128), lambda i: (i, 0, 0)),
        compiler_params=pltpu.CompilerParams(
            dimension_semantics=("parallel",),
            vmem_limit_bytes=32 * 1024 * 1024,
        ),
    )(s_arr, tgt, x, m)

    # Reduce the tiny (num_tiles, 1, 128) partials on the host side of the call.
    return jnp.sum(partials)


def ldam_loss_ref(x, target, m_list, s):
    # Pure-JAX reference of the PyTorch forward (weight=None, mean reduction).
    _, c = x.shape
    onehot = jax.nn.one_hot(target, c, dtype=x.dtype)
    batch_m = (m_list[None, :] @ onehot.T).reshape(-1, 1)
    z = s * jnp.where(onehot > 0, x - batch_m, x)
    logp = jax.nn.log_softmax(z, axis=1)
    return -jnp.mean(jnp.sum(logp * onehot, axis=1))


if __name__ == "__main__":
    key = jax.random.PRNGKey(0)
    max_m, s = 0.2, 30.0

    # --- Test 1: small demo consistent with the module (N=8 samples, C=16 classes)
    n1, c1 = 8, 16
    cls_num_list = np.array([100, 80, 60, 50, 40, 30, 25, 20,
                             15, 12, 10, 8, 6, 5, 4, 2], dtype=np.float64)
    m_np = 1.0 / np.sqrt(np.sqrt(cls_num_list))
    m_np = m_np * (max_m / np.max(m_np))
    m_list1 = jnp.asarray(m_np, dtype=jnp.float32)

    kx, kt, key = jax.random.split(key, 3)
    x1 = jax.random.normal(kx, (n1, c1), dtype=jnp.float32)
    t1 = jax.random.randint(kt, (n1,), 0, c1, dtype=jnp.int32)

    got1 = jax.block_until_ready(ldam_loss_pallas(x1, t1, m_list1, s))
    ref1 = ldam_loss_ref(x1, t1, m_list1, s)
    assert jnp.allclose(got1, ref1, rtol=1e-5, atol=1e-5), (got1, ref1)

    # --- Test 2: exercises the batch grid, parallel partials and ragged last tile
    n2, c2 = 300, 256
    cls2 = np.linspace(2.0, 500.0, c2)
    m2 = 1.0 / np.sqrt(np.sqrt(cls2))
    m2 = m2 * (max_m / np.max(m2))
    m_list2 = jnp.asarray(m2, dtype=jnp.float32)

    kx2, kt2, key = jax.random.split(key, 3)
    x2 = jax.random.normal(kx2, (n2, c2), dtype=jnp.float32)
    t2 = jax.random.randint(kt2, (n2,), 0, c2, dtype=jnp.int32)

    got2 = jax.block_until_ready(ldam_loss_pallas(x2, t2, m_list2, s, tile_n=128))
    ref2 = ldam_loss_ref(x2, t2, m_list2, s)
    assert jnp.allclose(got2, ref2, rtol=1e-4, atol=1e-4), (got2, ref2)

    print("KERNEL_OK")
</pallas_src>

<mosaic_0001>
module attributes {stable_mosaic.version = 11 : i64} {
  func.func @ldam_kernel(%arg0: i32, %arg1: memref<1xf32, #tpu.memory_space<smem>>, %arg2: memref<8x1xi32, #tpu.memory_space<vmem>>, %arg3: memref<8x16xf32, #tpu.memory_space<vmem>>, %arg4: memref<1x16xf32, #tpu.memory_space<vmem>>, %arg5: memref<1x1x128xf32, #tpu.memory_space<vmem>>) attributes {dimension_semantics = [#tpu.dimension_semantics<parallel>], iteration_bounds = array<i64: 1>, scalar_prefetch = 0 : i64, scratch_operands = 0 : i64, tpu.core_type = #tpu.core_type<tc>, window_params = [{transform_indices = @transform_0, window_bounds = array<i64: 1>}, {transform_indices = @transform_1, window_bounds = array<i64: 8, 1>}, {transform_indices = @transform_2, window_bounds = array<i64: 8, 16>}, {pipeline_mode = #tpu.pipeline_mode<synchronous>, transform_indices = @transform_3, window_bounds = array<i64: 1, 16>}, {transform_indices = @transform_4, window_bounds = array<i64: 1, 1, 128>}]} {
    %c0 = arith.constant 0 : index
    %c0_0 = arith.constant 0 : index
    %0 = vector.load %arg3[%c0, %c0_0] : memref<8x16xf32, #tpu.memory_space<vmem>>, vector<8x16xf32>
    %c0_1 = arith.constant 0 : index
    %c0_2 = arith.constant 0 : index
    %1 = vector.load %arg4[%c0_1, %c0_2] : memref<1x16xf32, #tpu.memory_space<vmem>>, vector<1x16xf32>
    %c0_3 = arith.constant 0 : index
    %c0_4 = arith.constant 0 : index
    %2 = vector.load %arg2[%c0_3, %c0_4] : memref<8x1xi32, #tpu.memory_space<vmem>>, vector<8x1xi32>
    %c0_5 = arith.constant 0 : index
    %3 = memref.load %arg1[%c0_5] : memref<1xf32, #tpu.memory_space<smem>>
    %4 = tpu.iota {dimensions = array<i32: 1>} : vector<8x16xi32>
    %5 = vector.broadcast %2 : vector<8x1xi32> to vector<8x16xi32>
    %6 = arith.cmpi eq, %4, %5 : vector<8x16xi32>
    %cst = arith.constant 0.000000e+00 : f32
    %7 = vector.shape_cast %1 : vector<1x16xf32> to vector<1x16xf32>
    %8 = vector.broadcast %7 : vector<1x16xf32> to vector<8x16xf32>
    %9 = vector.broadcast %cst : f32 to vector<8x16xf32>
    %10 = arith.select %6, %8, %9 : vector<8x16xi1>, vector<8x16xf32>
    %cst_6 = arith.constant dense<0.000000e+00> : vector<8xf32>
    %11 = vector.multi_reduction <add>, %10, %cst_6 [1] : vector<8x16xf32> to vector<8xf32>
    %12 = vector.shape_cast %11 : vector<8xf32> to vector<8x1xf32>
    %13 = vector.broadcast %12 : vector<8x1xf32> to vector<8x16xf32>
    %14 = arith.subf %0, %13 : vector<8x16xf32>
    %15 = arith.select %6, %14, %0 : vector<8x16xi1>, vector<8x16xf32>
    %16 = vector.broadcast %3 : f32 to vector<8x16xf32>
    %17 = arith.mulf %16, %15 : vector<8x16xf32>
    %cst_7 = arith.constant dense<0xFF800000> : vector<8xf32>
    %18 = vector.multi_reduction <maximumf>, %17, %cst_7 [1] : vector<8x16xf32> to vector<8xf32>
    %19 = vector.shape_cast %18 : vector<8xf32> to vector<8x1xf32>
    %20 = vector.broadcast %19 : vector<8x1xf32> to vector<8x16xf32>
    %21 = arith.subf %17, %20 : vector<8x16xf32>
    %22 = math.exp %21 : vector<8x16xf32>
    %cst_8 = arith.constant dense<0.000000e+00> : vector<8xf32>
    %23 = vector.multi_reduction <add>, %22, %cst_8 [1] : vector<8x16xf32> to vector<8xf32>
    %24 = vector.shape_cast %23 : vector<8xf32> to vector<8x1xf32>
    %25 = math.log %24 : vector<8x1xf32>
    %26 = arith.addf %25, %19 : vector<8x1xf32>
    %cst_9 = arith.constant 0.000000e+00 : f32
    %27 = vector.broadcast %cst_9 : f32 to vector<8x16xf32>
    %28 = arith.select %6, %17, %27 : vector<8x16xi1>, vector<8x16xf32>
    %cst_10 = arith.constant dense<0.000000e+00> : vector<8xf32>
    %29 = vector.multi_reduction <add>, %28, %cst_10 [1] : vector<8x16xf32> to vector<8xf32>
    %30 = vector.shape_cast %29 : vector<8xf32> to vector<8x1xf32>
    %31 = arith.subf %26, %30 : vector<8x1xf32>
    %c8_i32 = arith.constant 8 : i32
    %32 = arith.muli %arg0, %c8_i32 : i32
    %33 = tpu.iota {dimensions = array<i32: 0>} : vector<8x1xi32>
    %34 = vector.broadcast %32 : i32 to vector<8x1xi32>
    %35 = arith.addi %34, %33 : vector<8x1xi32>
    %c8_i32_11 = arith.constant 8 : i32
    %36 = vector.broadcast %c8_i32_11 : i32 to vector<8x1xi32>
    %37 = arith.cmpi slt, %35, %36 : vector<8x1xi32>
    %cst_12 = arith.constant 0.000000e+00 : f32
    %38 = vector.broadcast %cst_12 : f32 to vector<8x1xf32>
    %39 = arith.select %37, %31, %38 : vector<8x1xi1>, vector<8x1xf32>
    %40 = vector.shape_cast %39 : vector<8x1xf32> to vector<1x8x1xf32>
    %cst_13 = arith.constant dense<0.000000e+00> : vector<1xf32>
    %41 = vector.multi_reduction <add>, %40, %cst_13 [1, 2] : vector<1x8x1xf32> to vector<1xf32>
    %42 = vector.shape_cast %41 : vector<1xf32> to vector<1x1x1xf32>
    %43 = vector.extract %42[0, 0, 0] : f32 from vector<1x1x1xf32>
    %cst_14 = arith.constant 1.250000e-01 : f32
    %44 = arith.mulf %43, %cst_14 : f32
    %45 = tpu.iota {dimensions = array<i32: 2>} : vector<1x1x128xi32>
    %c0_i32 = arith.constant 0 : i32
    %46 = vector.broadcast %c0_i32 : i32 to vector<1x1x128xi32>
    %47 = arith.cmpi eq, %45, %46 : vector<1x1x128xi32>
    %cst_15 = arith.constant 0.000000e+00 : f32
    %48 = vector.broadcast %44 : f32 to vector<1x1x128xf32>
    %49 = vector.broadcast %cst_15 : f32 to vector<1x1x128xf32>
    %50 = arith.select %47, %48, %49 : vector<1x1x128xi1>, vector<1x1x128xf32>
    %c0_16 = arith.constant 0 : index
    %c0_17 = arith.constant 0 : index
    %c0_18 = arith.constant 0 : index
    %51 = vector.load %arg5[%c0_16, %c0_17, %c0_18] : memref<1x1x128xf32, #tpu.memory_space<vmem>>, vector<1x1x128xf32>
    tpu.vector_store %arg5[%c0_16, %c0_17, %c0_18], %50 {strides = array<i32>} : memref<1x1x128xf32, #tpu.memory_space<vmem>>, vector<1x1x128xf32>,
    return
  }
  func.func @transform_0(%arg0: i32) -> i32 {
    %c0_i32 = arith.constant 0 : i32
    %c0_i32_0 = arith.constant 0 : i32
    return %c0_i32 : i32
  }
  func.func @transform_1(%arg0: i32) -> (i32, i32) {
    %c0_i32 = arith.constant 0 : i32
    %c0_i32_0 = arith.constant 0 : i32
    return %arg0, %c0_i32 : i32, i32
  }
  func.func @transform_2(%arg0: i32) -> (i32, i32) {
    %c0_i32 = arith.constant 0 : i32
    %c0_i32_0 = arith.constant 0 : i32
    return %arg0, %c0_i32 : i32, i32
  }
  func.func @transform_3(%arg0: i32) -> (i32, i32) {
    %c0_i32 = arith.constant 0 : i32
    %c0_i32_0 = arith.constant 0 : i32
    %c0_i32_1 = arith.constant 0 : i32
    return %c0_i32, %c0_i32_0 : i32, i32
  }
  func.func @transform_4(%arg0: i32) -> (i32, i32, i32) {
    %c0_i32 = arith.constant 0 : i32
    %c0_i32_0 = arith.constant 0 : i32
    %c0_i32_1 = arith.constant 0 : i32
    return %arg0, %c0_i32, %c0_i32_0 : i32, i32, i32
  }
}

</mosaic_0001>

<llo_original>
// kernel: tpu_custom_call.1
$region0: #{tpu_custom_call.1}
  #allocation0 [shape = 'u32[]', space=smem, size = 0x4, offset = 0x4, fixed_abs, tag = 'smem constant byte address 0x4 - core index']
  #allocation1 [shape = 'u32[72,128]{1,0:T(1,128)}', space=vmem, size = 0x9000, scoped, tag = 'internal scratch']
  #allocation2 [shape = 'f32[1]{0:T(128)S(6)}', space=smem, size = 0x200, scoped, tag = 'scoped memory for tpu_custom_call.1']
  %s0 = inlined_call_operand.<no memory space> [shape: f32[1], index: 0, kind: input, shape index: {}]
  %s1 = inlined_call_operand.vmem [shape: s32[8,1], index: 1, kind: input, shape index: {}]
  %s2 = inlined_call_operand.vmem [shape: f32[8,16], index: 2, kind: input, shape index: {}]
  %s3 = inlined_call_operand.vmem [shape: f32[1,16], index: 3, kind: input, shape index: {}]
  %s4 = inlined_call_operand.hbm [shape: f32[1,1,128], index: 4, kind: output, shape index: {}]
  %s5 = sld [smem:[#allocation0]]
  $region26: #{tpu_custom_call.1} parent=0
    _
  %s7 = ssub.s32 1, %s5
  %s8 = scalar_select 0, %s7, %s5
  %9 = sst [smem:[#allocation2]] %s0
  $region1: #{tpu_custom_call.1} parent=0
    #allocation3 [shape = 'u8[512]{0}', space=vmem, size = 0x400, scoped, tag = 'output window, operand 0, single buffered']
    #allocation4 [shape = 's32[1]{0}', space=sflag, size = 0x4, scoped, tag = 'scoped memory for tpu_custom_call.1']
    %10 = vsyncpa [#allocation4], 0
    // Predicated region
    $region2: #{tpu_custom_call.1} parent=1 // pred_check
      _
    $region3: #{tpu_custom_call.1} parent=1 // pred_check_branch
      %12 = sbr.rel (0) target = $region5
    $region4: #{tpu_custom_call.1} parent=1 // pred_region
      _
    $region5: #{tpu_custom_call.1} parent=1 // pred_fallthru
      _
    // Predicated region
    $region6: #{tpu_custom_call.1} parent=1 // pred_check
      _
    $region7: #{tpu_custom_call.1} parent=1 // pred_check_branch
      %14 = sbr.rel (0) target = $region9
    $region8: #{tpu_custom_call.1} parent=1 // pred_region
      _
    $region9: #{tpu_custom_call.1} parent=1 // pred_fallthru
      _
    // Predicated region
    $region10: #{tpu_custom_call.1} parent=1 // pred_check
      _
    $region11: #{tpu_custom_call.1} parent=1 // pred_check_branch
      %16 = sbr.rel (0) target = $region13
    $region12: #{tpu_custom_call.1} parent=1 // pred_region
      _
    $region13: #{tpu_custom_call.1} parent=1 // pred_fallthru
      _
    // Predicated region
    $region14: #{tpu_custom_call.1} parent=1 // pred_check
      _
    $region15: #{tpu_custom_call.1} parent=1 // pred_check_branch
      %18 = sbr.rel (0) target = $region17
    $region16: #{tpu_custom_call.1} parent=1 // pred_region
      _
    $region17: #{tpu_custom_call.1} parent=1 // pred_fallthru
      _
    %v19 = vld [vmem:[%s2] sm:$0xff]
    %v20 = vld [vmem:[%s3] sm:$0x1]
    %v21 = vld [vmem:[%s1] sm:$0xff]
    %s22 = sld [smem:[#allocation2]]
    %v23 = vlaneseq
    %v24 = vand.u32 %v23, 127
    %25 = vset.pattern.permute.xlu0 0
    %26 = vperm.xlu0 %25, %v21
    %v27 = vpop.permute.xlu0 %26
    %vm28 = vcmp.eq.s32.totalorder %v24, %v27
    %v30 = vperm.slane %v20, 0
    %v32 = vsel %vm28, %v30, 0.0
    %vm33 = vcmask 130048
    %v34 = vsel %vm33, %v32, 0.0
    %35 = vadd.xlane.f32.xlu0 %v34
    %v36 = vpop.xlane.xlu0 %35
    %v37 = vsub.f32 %v19, %v36
    %v38 = vsel %vm28, %v37, %v19
    %v39 = vstv %s22
    %v40 = vmul.f32 %v39, %v38
    %v41 = vsel %vm33, %v40, -inf
    %42 = vmax.xlane.f32.xlu0 %v41
    %v43 = vpop.xlane.xlu0 %42
    %v44 = vsub.f32 %v40, %v43
    %v45 = vmul.f32 %v44, 1.442695
    %v46 = vpow.pop %v45
    %v47 = vsel %vm33, %v46, 0.0
    %48 = vadd.xlane.f32.xlu0 %v47
    %v49 = vpop.xlane.xlu0 %48
    %v50 = vlog2.pop %v49
    %v51 = vmul.f32 %v50, 0.6931472
    %v52 = vadd.f32 %v51, %v43
    %v53 = vsel %vm28, %v40, 0.0
    %v54 = vsel %vm33, %v53, 0.0
    %55 = vadd.xlane.f32.xlu0 %v54
    %v56 = vpop.xlane.xlu0 %55
    %v57 = vsub.f32 %v52, %v56
    %s58 = smul.u32 0, 8
    %v59 = vlaneseq
    %v60 = vshrl.u32 %v59, 7
    %v61 = vstv %s58
    %v62 = vadd.s32 %v61, %v60
    %vm63 = vcmp.lt.s32.totalorder %v62, 8
    %v64 = vsel %vm63, %v57, 0.0
    %vm65 = vcmask 7168
    %v66 = vsel %vm65, %v64, 0.0
    %67 = vadd.xlane.f32.xlu0 %v66
    %v68 = vpop.xlane.xlu0 %67
    %v69 = vrot.slane %v68, 4
    %v70 = vadd.f32 %v68, %v69
    %v71 = vrot.slane %v70, 2
    %v72 = vadd.f32 %v70, %v71
    %v73 = vrot.slane %v72, 1
    %v74 = vadd.f32 %v72, %v73
    %s75 = vtos %v74
    %s76 = smul.f32 %s75, 0.125
    %vm77 = vcmp.eq.s32.totalorder %v24, 0
    %v78 = vstv %s76
    %v79 = vsel %vm77, %v78, 0.0
    %80 = vst [vmem:[#allocation3] sm:$0x1] %v79
    // Predicated region
    $region18: #{tpu_custom_call.1} parent=1 // pred_check
      _
    $region19: #{tpu_custom_call.1} parent=1 // pred_check_branch
      %82 = sbr.rel (0) target = $region21
    $region20: #{tpu_custom_call.1} parent=1 // pred_region
      %84 = vsyncadd [#allocation4], 0
      %s86 = sshll.u32 [#allocation3], 4
      %s87 = int_to_ptr.vmem [resolvable:$true] %s86
      %s88 = sshll.u32 %s4, 4
      %s89 = int_to_ptr.hbm [resolvable:$true] %s88
      %91 = dma.vmem_to_hbm [thread:$0]  %s87, 16, %s89, [#allocation4]
    $region21: #{tpu_custom_call.1} parent=1 // pred_fallthru
      _
    // Predicated region
    $region22: #{tpu_custom_call.1} parent=1 // pred_check
      _
    $region23: #{tpu_custom_call.1} parent=1 // pred_check_branch
      %93 = sbr.rel (0) target = $region25
    $region24: #{tpu_custom_call.1} parent=1 // pred_region
      %95 = dma.done [#allocation4], 16
    $region25: #{tpu_custom_call.1} parent=1 // pred_fallthru
      _
    %96 = vsyncpa [#allocation4], 1

</llo_original>
